<compile_context>
chip_gen: v7x
topology: tpu7x:2x2x1
jax: 0.10.0
libtpu: 0.0.40
codegen_flags: <defaults>
</compile_context>

<pallas_src>
import functools

import jax
import jax.numpy as jnp
from jax import lax
from jax.experimental import pallas as pl
from jax.experimental.pallas import tpu as pltpu

_SQRT_HALF = 0.7071067811865476


def _round_up(n, m):
    return (n + m - 1) // m * m


def _default_vmem_limit():
    # ~3/4 of physical VMEM, capped at 96 MiB: -> 96 MiB on v5e/v6e (128 MiB
    # physical), 48 MiB on v7x (64 MiB physical) so the compiler keeps its own
    # scratch headroom.
    try:
        cap = getattr(pltpu.get_tpu_info(), "vmem_capacity_bytes",
                      128 * 1024 * 1024)
        return int(min(cap * 3 // 4, 96 * 1024 * 1024))
    except Exception:
        return 48 * 1024 * 1024


def _ffn_kernel(*refs, n_h, unroll):
    if len(refs) == 7:
        x_ref, w1_ref, b1_ref, w2_ref, b2_ref, o_ref, acc_ref = refs
    else:
        # f32 output: accumulate directly into the resident output block
        # (saves the scratch buffer and the final copy pass).
        x_ref, w1_ref, b1_ref, w2_ref, b2_ref, o_ref = refs
        acc_ref = o_ref

    acc_ref[...] = jnp.zeros_like(acc_ref)

    def body(j, carry):
        # First linear, hidden chunk j: (tm, E) @ (E, th) -> (tm, th), f32 acc.
        h = jnp.dot(x_ref[...], w1_ref[j], preferred_element_type=jnp.float32)
        h = h + b1_ref[j].astype(jnp.float32)              # (1, th) broadcast
        # Exact erf-based GELU, matching torch.nn.GELU default.
        h = 0.5 * h * (1.0 + lax.erf(h * jnp.float32(_SQRT_HALF)))
        # Partial second linear: (tm, th) @ (th, E) -> (tm, E), f32 accumulate.
        acc_ref[...] += jnp.dot(h.astype(w2_ref.dtype), w2_ref[j],
                                preferred_element_type=jnp.float32)
        return carry

    lax.fori_loop(0, n_h, body, 0, unroll=unroll)

    o_ref[...] = (acc_ref[...] + b2_ref[...].astype(jnp.float32)
                  ).astype(o_ref.dtype)


@functools.partial(
    jax.jit,
    static_argnames=("block_m", "block_h", "compute_dtype",
                     "vmem_limit_bytes"))
def feed_forward(x, w1, b1, w2, b2, *, block_m=512, block_h=512,
                 compute_dtype=None, vmem_limit_bytes=None):
    """x: (..., embed_dim) -> (..., embed_dim).

    Weights stored (in_features, out_features): y = GELU(x @ w1 + b1) @ w2 + b2.
    `compute_dtype=jnp.bfloat16` enables the bf16 MXU path (f32 accumulation
    is kept either way).  block_m / block_h are per-generation tuning knobs.
    """
    orig_shape = x.shape
    orig_dtype = x.dtype
    embed_dim = orig_shape[-1]
    mlp_dim = w1.shape[1]

    x2d = x.reshape(-1, embed_dim)
    m = x2d.shape[0]

    if compute_dtype is not None:
        x2d = x2d.astype(compute_dtype)
        w1 = w1.astype(compute_dtype)
        b1 = b1.astype(compute_dtype)
        w2 = w2.astype(compute_dtype)
        b2 = b2.astype(compute_dtype)

    # Lane-dense padding of the feature dims (no-op for typical ViT sizes).
    e_p = _round_up(embed_dim, 128)

    # Hidden chunk: multiple of 128; hidden dim padded to a chunk multiple.
    th = min(block_h, _round_up(mlp_dim, 128))
    h_p = _round_up(mlp_dim, th)
    n_h = h_p // th

    # Rows: pad only to a sublane multiple (tiny), NOT to a tile multiple.
    m_p = _round_up(m, 16)
    tm = min(_round_up(block_m, 16), m_p)
    # Prefer >= 2 row tiles so the "parallel" axis can split across v7x's two
    # TensorCores (harmless on single-core chips).
    if tm > 16 and pl.cdiv(m_p, tm) < 2:
        tm = max(16, _round_up(pl.cdiv(m_p, 2), 16))
    grid_m = pl.cdiv(m_p, tm)   # partial last tile: OOB rows masked on store

    # Zero padding is mathematically inert: GELU(0) = 0, padded W2 rows/cols
    # are zero, padded output columns are sliced off.
    x_p = jnp.pad(x2d, ((0, m_p - m), (0, e_p - embed_dim)))
    w1_p = jnp.pad(w1, ((0, e_p - embed_dim), (0, h_p - mlp_dim)))
    w2_p = jnp.pad(w2, ((0, h_p - mlp_dim), (0, e_p - embed_dim)))
    b1_p = jnp.pad(b1, (0, h_p - mlp_dim))
    b2_p = jnp.pad(b2, (0, e_p - embed_dim)).reshape(1, e_p)

    # Pre-chunk the weights along the hidden dim so all dynamic indexing in
    # the kernel is on a leading (non-tiled) axis.
    w1_c = w1_p.reshape(e_p, n_h, th).transpose(1, 0, 2)   # (n_h, E, th)
    w2_c = w2_p.reshape(n_h, th, e_p)                       # (n_h, th, E)
    b1_c = b1_p.reshape(n_h, 1, th)                         # (n_h, 1, th)

    compute_itemsize = jnp.dtype(x_p.dtype).itemsize
    out_itemsize = jnp.dtype(orig_dtype).itemsize
    cost = pl.CostEstimate(
        flops=4 * grid_m * tm * e_p * h_p,           # two matmuls @ 2*M*E*H
        transcendentals=grid_m * tm * h_p,           # erf per hidden element
        bytes_accessed=int(
            (x_p.size + w1_c.size + w2_c.size + b1_c.size + b2_p.size)
            * compute_itemsize + m_p * e_p * out_itemsize),
    )

    if vmem_limit_bytes is None:
        vmem_limit_bytes = _default_vmem_limit()

    kernel = functools.partial(_ffn_kernel, n_h=n_h, unroll=n_h <= 8)

    use_scratch = orig_dtype != jnp.float32
    scratch_shapes = [pltpu.VMEM((tm, e_p), jnp.float32)] if use_scratch else []

    out = pl.pallas_call(
        kernel,
        out_shape=jax.ShapeDtypeStruct((m_p, e_p), orig_dtype),
        grid_spec=pltpu.PrefetchScalarGridSpec(
            num_scalar_prefetch=0,
            grid=(grid_m,),
            in_specs=[
                pl.BlockSpec((tm, e_p), lambda i: (i, 0)),          # x rows
                pl.BlockSpec((n_h, e_p, th), lambda i: (0, 0, 0)),  # W1 resident
                pl.BlockSpec((n_h, 1, th), lambda i: (0, 0, 0)),    # b1 resident
                pl.BlockSpec((n_h, th, e_p), lambda i: (0, 0, 0)),  # W2 resident
                pl.BlockSpec((1, e_p), lambda i: (0, 0)),           # b2 resident
            ],
            out_specs=pl.BlockSpec((tm, e_p), lambda i: (i, 0)),
            scratch_shapes=scratch_shapes,
        ),
        compiler_params=pltpu.CompilerParams(
            dimension_semantics=("parallel",),
            vmem_limit_bytes=vmem_limit_bytes,
        ),
        cost_estimate=cost,
    )(x_p, w1_c, b1_c, w2_c, b2_p)

    return out[:m, :embed_dim].reshape(orig_shape)


def init_params(key, embed_dim, mlp_dim, dtype=jnp.float32):
    """Deterministic init matching nn.Linear's U(-1/sqrt(fan_in), 1/sqrt(fan_in))."""
    k1, k2, k3, k4 = jax.random.split(key, 4)
    bound1 = 1.0 / (embed_dim ** 0.5)
    bound2 = 1.0 / (mlp_dim ** 0.5)
    w1 = jax.random.uniform(k1, (embed_dim, mlp_dim), dtype, -bound1, bound1)
    b1 = jax.random.uniform(k2, (mlp_dim,), dtype, -bound1, bound1)
    w2 = jax.random.uniform(k3, (mlp_dim, embed_dim), dtype, -bound2, bound2)
    b2 = jax.random.uniform(k4, (embed_dim,), dtype, -bound2, bound2)
    return w1, b1, w2, b2


def _reference(x, w1, b1, w2, b2):
    h = x @ w1 + b1
    h = jax.nn.gelu(h, approximate=False)
    return h @ w2 + b2


if __name__ == "__main__":
    batch, seq, embed_dim, mlp_dim = 2, 8, 32, 64

    key = jax.random.PRNGKey(0)
    kx, kp = jax.random.split(key)
    x = jax.random.normal(kx, (batch, seq, embed_dim), jnp.float32)
    w1, b1, w2, b2 = init_params(kp, embed_dim, mlp_dim)

    out = feed_forward(x, w1, b1, w2, b2)
    out = jax.block_until_ready(out)

    ref = _reference(x, w1, b1, w2, b2)
    assert out.shape == x.shape
    assert jnp.allclose(out, ref, atol=1e-5, rtol=1e-5), "mismatch vs reference"

    print("KERNEL_OK")
</pallas_src>

<mosaic_0001>
module attributes {stable_mosaic.version = 11 : i64} {
  func.func @_ffn_kernel(%arg0: i32, %arg1: memref<16x128xf32, #tpu.memory_space<vmem>>, %arg2: memref<1x128x128xf32, #tpu.memory_space<vmem>>, %arg3: memref<1x1x128xf32, #tpu.memory_space<vmem>>, %arg4: memref<1x128x128xf32, #tpu.memory_space<vmem>>, %arg5: memref<1x128xf32, #tpu.memory_space<vmem>>, %arg6: memref<16x128xf32, #tpu.memory_space<vmem>>) attributes {dimension_semantics = [#tpu.dimension_semantics<parallel>], iteration_bounds = array<i64: 1>, scalar_prefetch = 0 : i64, scratch_operands = 0 : i64, tpu.core_type = #tpu.core_type<tc>, window_params = [{transform_indices = @transform_0, window_bounds = array<i64: 16, 128>}, {pipeline_mode = #tpu.pipeline_mode<synchronous>, transform_indices = @transform_1, window_bounds = array<i64: 1, 128, 128>}, {pipeline_mode = #tpu.pipeline_mode<synchronous>, transform_indices = @transform_2, window_bounds = array<i64: 1, 1, 128>}, {pipeline_mode = #tpu.pipeline_mode<synchronous>, transform_indices = @transform_3, window_bounds = array<i64: 1, 128, 128>}, {pipeline_mode = #tpu.pipeline_mode<synchronous>, transform_indices = @transform_4, window_bounds = array<i64: 1, 128>}, {transform_indices = @transform_5, window_bounds = array<i64: 16, 128>}]} {
    %cst = arith.constant 0.000000e+00 : f32
    %0 = vector.broadcast %cst : f32 to vector<16x128xf32>
    %c0 = arith.constant 0 : index
    %c0_0 = arith.constant 0 : index
    %1 = vector.load %arg6[%c0, %c0_0] : memref<16x128xf32, #tpu.memory_space<vmem>>, vector<16x128xf32>
    tpu.vector_store %arg6[%c0, %c0_0], %0 {strides = array<i32>} : memref<16x128xf32, #tpu.memory_space<vmem>>, vector<16x128xf32>,
    %c0_i32 = arith.constant 0 : i32
    %c0_1 = arith.constant 0 : index
    %c0_2 = arith.constant 0 : index
    %2 = vector.load %arg1[%c0_1, %c0_2] : memref<16x128xf32, #tpu.memory_space<vmem>>, vector<16x128xf32>
    %3 = arith.index_cast %c0_i32 : i32 to index
    %c0_3 = arith.constant 0 : index
    %c0_4 = arith.constant 0 : index
    %4 = vector.load %arg2[%3, %c0_3, %c0_4] : memref<1x128x128xf32, #tpu.memory_space<vmem>>, vector<1x128x128xf32>
    %5 = vector.shape_cast %4 : vector<1x128x128xf32> to vector<128x128xf32>
    %cst_5 = arith.constant dense<0.000000e+00> : vector<16x128xf32>
    %6 = tpu.matmul %2, %5, %cst_5 {dimension_numbers = #tpu.dot_dimension_numbers<[1], [0], [0], [1], [0, 0, 1, 1], [], []>} : vector<16x128xf32>, vector<128x128xf32>, vector<16x128xf32> -> vector<16x128xf32>
    %7 = arith.index_cast %c0_i32 : i32 to index
    %c0_6 = arith.constant 0 : index
    %c0_7 = arith.constant 0 : index
    %8 = vector.load %arg3[%7, %c0_6, %c0_7] : memref<1x1x128xf32, #tpu.memory_space<vmem>>, vector<1x1x128xf32>
    %9 = vector.shape_cast %8 : vector<1x1x128xf32> to vector<1x128xf32>
    %10 = vector.broadcast %9 : vector<1x128xf32> to vector<16x128xf32>
    %11 = arith.addf %6, %10 : vector<16x128xf32>
    %cst_8 = arith.constant 5.000000e-01 : f32
    %12 = vector.broadcast %cst_8 : f32 to vector<16x128xf32>
    %13 = arith.mulf %12, %11 : vector<16x128xf32>
    %cst_9 = arith.constant 0.707106769 : f32
    %14 = vector.broadcast %cst_9 : f32 to vector<16x128xf32>
    %15 = arith.mulf %11, %14 : vector<16x128xf32>
    %16 = math.erf %15 : vector<16x128xf32>
    %cst_10 = arith.constant 1.000000e+00 : f32
    %17 = vector.broadcast %cst_10 : f32 to vector<16x128xf32>
    %18 = arith.addf %17, %16 : vector<16x128xf32>
    %19 = arith.mulf %13, %18 : vector<16x128xf32>
    %c0_11 = arith.constant 0 : index
    %c0_12 = arith.constant 0 : index
    %20 = vector.load %arg6[%c0_11, %c0_12] : memref<16x128xf32, #tpu.memory_space<vmem>>, vector<16x128xf32>
    %21 = arith.index_cast %c0_i32 : i32 to index
    %c0_13 = arith.constant 0 : index
    %c0_14 = arith.constant 0 : index
    %22 = vector.load %arg4[%21, %c0_13, %c0_14] : memref<1x128x128xf32, #tpu.memory_space<vmem>>, vector<1x128x128xf32>
    %23 = vector.shape_cast %22 : vector<1x128x128xf32> to vector<128x128xf32>
    %cst_15 = arith.constant dense<0.000000e+00> : vector<16x128xf32>
    %24 = tpu.matmul %19, %23, %cst_15 {dimension_numbers = #tpu.dot_dimension_numbers<[1], [0], [0], [1], [0, 0, 1, 1], [], []>} : vector<16x128xf32>, vector<128x128xf32>, vector<16x128xf32> -> vector<16x128xf32>
    %25 = arith.addf %20, %24 : vector<16x128xf32>
    %c0_16 = arith.constant 0 : index
    %c0_17 = arith.constant 0 : index
    %26 = vector.load %arg6[%c0_16, %c0_17] : memref<16x128xf32, #tpu.memory_space<vmem>>, vector<16x128xf32>
    tpu.vector_store %arg6[%c0_16, %c0_17], %25 {strides = array<i32>} : memref<16x128xf32, #tpu.memory_space<vmem>>, vector<16x128xf32>,
    %c1_i32 = arith.constant 1 : i32
    %c0_18 = arith.constant 0 : index
    %c0_19 = arith.constant 0 : index
    %27 = vector.load %arg6[%c0_18, %c0_19] : memref<16x128xf32, #tpu.memory_space<vmem>>, vector<16x128xf32>
    %c0_20 = arith.constant 0 : index
    %c0_21 = arith.constant 0 : index
    %28 = vector.load %arg5[%c0_20, %c0_21] : memref<1x128xf32, #tpu.memory_space<vmem>>, vector<1x128xf32>
    %29 = vector.broadcast %28 : vector<1x128xf32> to vector<16x128xf32>
    %30 = arith.addf %27, %29 : vector<16x128xf32>
    %c0_22 = arith.constant 0 : index
    %c0_23 = arith.constant 0 : index
    %31 = vector.load %arg6[%c0_22, %c0_23] : memref<16x128xf32, #tpu.memory_space<vmem>>, vector<16x128xf32>
    tpu.vector_store %arg6[%c0_22, %c0_23], %30 {strides = array<i32>} : memref<16x128xf32, #tpu.memory_space<vmem>>, vector<16x128xf32>,
    return
  }
  func.func @transform_0(%arg0: i32) -> (i32, i32) {
    %c0_i32 = arith.constant 0 : i32
    %c0_i32_0 = arith.constant 0 : i32
    return %arg0, %c0_i32 : i32, i32
  }
  func.func @transform_1(%arg0: i32) -> (i32, i32, i32) {
    %c0_i32 = arith.constant 0 : i32
    %c0_i32_0 = arith.constant 0 : i32
    %c0_i32_1 = arith.constant 0 : i32
    %c0_i32_2 = arith.constant 0 : i32
    return %c0_i32, %c0_i32_0, %c0_i32_1 : i32, i32, i32
  }
  func.func @transform_2(%arg0: i32) -> (i32, i32, i32) {
    %c0_i32 = arith.constant 0 : i32
    %c0_i32_0 = arith.constant 0 : i32
    %c0_i32_1 = arith.constant 0 : i32
    %c0_i32_2 = arith.constant 0 : i32
    return %c0_i32, %c0_i32_0, %c0_i32_1 : i32, i32, i32
  }
  func.func @transform_3(%arg0: i32) -> (i32, i32, i32) {
    %c0_i32 = arith.constant 0 : i32
    %c0_i32_0 = arith.constant 0 : i32
    %c0_i32_1 = arith.constant 0 : i32
    %c0_i32_2 = arith.constant 0 : i32
    return %c0_i32, %c0_i32_0, %c0_i32_1 : i32, i32, i32
  }
  func.func @transform_4(%arg0: i32) -> (i32, i32) {
    %c0_i32 = arith.constant 0 : i32
    %c0_i32_0 = arith.constant 0 : i32
    %c0_i32_1 = arith.constant 0 : i32
    return %c0_i32, %c0_i32_0 : i32, i32
  }
  func.func @transform_5(%arg0: i32) -> (i32, i32) {
    %c0_i32 = arith.constant 0 : i32
    %c0_i32_0 = arith.constant 0 : i32
    return %arg0, %c0_i32 : i32, i32
  }
}

</mosaic_0001>

<llo_original>
// kernel: feed_forward.1
$region0: #{feed_forward.1}
  #allocation0 [shape = 'u32[]', space=smem, size = 0x4, offset = 0x4, fixed_abs, tag = 'smem constant byte address 0x4 - core index']
  #allocation1 [shape = 'u32[144,128]{1,0:T(1,128)}', space=vmem, size = 0x12000, scoped, tag = 'internal scratch']
  %s0 = inlined_call_operand.vmem [shape: f32[16,128], index: 0, kind: input, shape index: {}]
  %s1 = inlined_call_operand.vmem [shape: f32[1,128,128], index: 1, kind: input, shape index: {}]
  %s2 = inlined_call_operand.vmem [shape: f32[1,1,128], index: 2, kind: input, shape index: {}]
  %s3 = inlined_call_operand.vmem [shape: f32[1,128,128], index: 3, kind: input, shape index: {}]
  %s4 = inlined_call_operand.vmem [shape: f32[1,128], index: 4, kind: input, shape index: {}]
  %s5 = inlined_call_operand.vmem [shape: f32[16,128], index: 5, kind: output, shape index: {}]
  %s6 = sld [smem:[#allocation0]]
  $region30: #{feed_forward.1} parent=0
    _
  %s8 = ssub.s32 1, %s6
  %s9 = scalar_select 0, %s8, %s6
  // Predicated region
  $region2: #{feed_forward.1} parent=0 // pred_check
    _
  $region3: #{feed_forward.1} parent=0 // pred_check_branch
    %11 = sbr.rel (0) target = $region5
  $region4: #{feed_forward.1} parent=0 // pred_region
    _
  $region5: #{feed_forward.1} parent=0 // pred_fallthru
    _
  // Predicated region
  $region6: #{feed_forward.1} parent=0 // pred_check
    _
  $region7: #{feed_forward.1} parent=0 // pred_check_branch
    %13 = sbr.rel (0) target = $region9
  $region8: #{feed_forward.1} parent=0 // pred_region
    _
  $region9: #{feed_forward.1} parent=0 // pred_fallthru
    _
  // Predicated region
  $region10: #{feed_forward.1} parent=0 // pred_check
    _
  $region11: #{feed_forward.1} parent=0 // pred_check_branch
    %15 = sbr.rel (0) target = $region13
  $region12: #{feed_forward.1} parent=0 // pred_region
    _
  $region13: #{feed_forward.1} parent=0 // pred_fallthru
    _
  // Predicated region
  $region14: #{feed_forward.1} parent=0 // pred_check
    _
  $region15: #{feed_forward.1} parent=0 // pred_check_branch
    %17 = sbr.rel (0) target = $region17
  $region16: #{feed_forward.1} parent=0 // pred_region
    _
  $region17: #{feed_forward.1} parent=0 // pred_fallthru
    _
  // Predicated region
  $region18: #{feed_forward.1} parent=0 // pred_check
    _
  $region19: #{feed_forward.1} parent=0 // pred_check_branch
    %19 = sbr.rel (0) target = $region21
  $region20: #{feed_forward.1} parent=0 // pred_region
    _
  $region21: #{feed_forward.1} parent=0 // pred_fallthru
    _
  %20 = vst [vmem:[%s5] sm:$0xff] 0.0
  %21 = vst [vmem:[%s5 + $0x8] sm:$0xff] 0.0
  %v22 = vld [vmem:[%s0] sm:$0xff]
  %v23 = vld [vmem:[%s0 + $0x8] sm:$0xff]
  %v24 = vld [vmem:[%s1] sm:$0xff]
  %v25 = vld [vmem:[%s1 + $0x8] sm:$0xff]
  %v26 = vld [vmem:[%s1 + $0x10] sm:$0xff]
  %v27 = vld [vmem:[%s1 + $0x18] sm:$0xff]
  %v28 = vld [vmem:[%s1 + $0x20] sm:$0xff]
  %v29 = vld [vmem:[%s1 + $0x28] sm:$0xff]
  %v30 = vld [vmem:[%s1 + $0x30] sm:$0xff]
  %v31 = vld [vmem:[%s1 + $0x38] sm:$0xff]
  %v32 = vld [vmem:[%s1 + $0x40] sm:$0xff]
  %v33 = vld [vmem:[%s1 + $0x48] sm:$0xff]
  %v34 = vld [vmem:[%s1 + $0x50] sm:$0xff]
  %v35 = vld [vmem:[%s1 + $0x58] sm:$0xff]
  %v36 = vld [vmem:[%s1 + $0x60] sm:$0xff]
  %v37 = vld [vmem:[%s1 + $0x68] sm:$0xff]
  %v38 = vld [vmem:[%s1 + $0x70] sm:$0xff]
  %v39 = vld [vmem:[%s1 + $0x78] sm:$0xff]
  %v40 = vld [vmem:[%s2] sm:$0x1]
  %v42 = vlaneseq
  %v43 = vshrl.u32 %v42, 7
  %v44 = vsub.s32 0, %v43
  %v45 = vrot.slane %v40, %v44
  %47 = vmatprep.subr.mxu0 0.0
  %48 = vmatpush1.msra.mxu0 %v24
  %49 = vmatprep.subr.mxu0 0.0
  %50 = vmatpush1.msra.mxu0 %v25
  %51 = vmatprep.subr.mxu0 0.0
  %52 = vmatpush1.msra.mxu0 %v26
  %53 = vmatprep.subr.mxu0 0.0
  %54 = vmatpush1.msra.mxu0 %v27
  %55 = vmatprep.subr.mxu0 0.0
  %56 = vmatpush1.msra.mxu0 %v28
  %57 = vmatprep.subr.mxu0 0.0
  %58 = vmatpush1.msra.mxu0 %v29
  %59 = vmatprep.subr.mxu0 0.0
  %60 = vmatpush1.msra.mxu0 %v30
  %61 = vmatprep.subr.mxu0 0.0
  %62 = vmatpush1.msra.mxu0 %v31
  %63 = vmatprep.subr.mxu0 0.0
  %64 = vmatpush1.msra.mxu0 %v32
  %65 = vmatprep.subr.mxu0 0.0
  %66 = vmatpush1.msra.mxu0 %v33
  %67 = vmatprep.subr.mxu0 0.0
  %68 = vmatpush1.msra.mxu0 %v34
  %69 = vmatprep.subr.mxu0 0.0
  %70 = vmatpush1.msra.mxu0 %v35
  %71 = vmatprep.subr.mxu0 0.0
  %72 = vmatpush1.msra.mxu0 %v36
  %73 = vmatprep.subr.mxu0 0.0
  %74 = vmatpush1.msra.mxu0 %v37
  %75 = vmatprep.subr.mxu0 0.0
  %76 = vmatpush1.msra.mxu0 %v38
  %77 = vmatprep.subr.mxu0 0.0
  %78 = vmatpush1.msra.mxu0 %v39
  %79 = vmatprep.subr.mxu0 0.0
  %80 = vmatpush1.msra.mxu0 0.0
  %81 = vmatprep.subr.mxu0 0.0
  %82 = vmatpush1.msra.mxu0 0.0
  %83 = vmatprep.subr.mxu0 0.0
  %84 = vmatpush1.msra.mxu0 0.0
  %85 = vmatprep.subr.mxu0 0.0
  %86 = vmatpush1.msra.mxu0 0.0
  %87 = vmatprep.subr.mxu0 0.0
  %88 = vmatpush1.msra.mxu0 0.0
  %89 = vmatprep.subr.mxu0 0.0
  %90 = vmatpush1.msra.mxu0 0.0
  %91 = vmatprep.subr.mxu0 0.0
  %92 = vmatpush1.msra.mxu0 0.0
  %93 = vmatprep.subr.mxu0 0.0
  %94 = vmatpush1.msra.mxu0 0.0
  %95 = vmatprep.subr.mxu0 0.0
  %96 = vmatpush1.msra.mxu0 0.0
  %97 = vmatprep.subr.mxu0 0.0
  %98 = vmatpush1.msra.mxu0 0.0
  %99 = vmatprep.subr.mxu0 0.0
  %100 = vmatpush1.msra.mxu0 0.0
  %101 = vmatprep.subr.mxu0 0.0
  %102 = vmatpush1.msra.mxu0 0.0
  %103 = vmatprep.subr.mxu0 0.0
  %104 = vmatpush1.msra.mxu0 0.0
  %105 = vmatprep.subr.mxu0 0.0
  %106 = vmatpush1.msra.mxu0 0.0
  %107 = vmatprep.subr.mxu0 0.0
  %108 = vmatpush1.msra.mxu0 0.0
  %109 = vmatprep.subr.mxu0 0.0
  %110 = vmatpush1.msra.mxu0 0.0
  %111 = vmatprep.mubr.f32.mxu0 0.0
  %112 = vmatmul.mubr.f32.gmra.mrb[0].mxu0 %v22
  %v113 = vpop.f32.mrb[0].mxu0
  %v114 = vadd.f32 %v45, %v113
  %v115 = vpop.f32.mrb[0].mxu0
  %116 = vmatprep.mubr.f32.mxu0 0.0
  %117 = vmatmul.mubr.f32.gmra.mrb[0].mxu0 %v23
  %v118 = vpop.f32.mrb[0].mxu0
  %v119 = vadd.f32 %v45, %v118
  %v120 = vpop.f32.mrb[0].mxu0
  %121 = vdwg.mxu0
  %v122 = vmul.f32 %v114, 0.5
  %v123 = vmul.f32 %v119, 0.5
  %v124 = vmul.f32 %v114, 0.70710677
  %v125 = vmul.f32 %v119, 0.70710677
  %v126 = verf.f32.pop %v124
  %v127 = verf.f32.pop %v125
  %v128 = vadd.f32 %v126, 1.0
  %v129 = vadd.f32 %v127, 1.0
  %v130 = vmul.f32 %v122, %v128
  %v131 = vmul.f32 %v123, %v129
  %v132 = vld [vmem:[%s5] sm:$0xff]
  %v133 = vld [vmem:[%s5 + $0x8] sm:$0xff]
  %v134 = vld [vmem:[%s3] sm:$0xff]
  %v135 = vld [vmem:[%s3 + $0x8] sm:$0xff]
  %v136 = vld [vmem:[%s3 + $0x10] sm:$0xff]
  %v137 = vld [vmem:[%s3 + $0x18] sm:$0xff]
  %v138 = vld [vmem:[%s3 + $0x20] sm:$0xff]
  %v139 = vld [vmem:[%s3 + $0x28] sm:$0xff]
  %v140 = vld [vmem:[%s3 + $0x30] sm:$0xff]
  %v141 = vld [vmem:[%s3 + $0x38] sm:$0xff]
  %v142 = vld [vmem:[%s3 + $0x40] sm:$0xff]
  %v143 = vld [vmem:[%s3 + $0x48] sm:$0xff]
  %v144 = vld [vmem:[%s3 + $0x50] sm:$0xff]
  %v145 = vld [vmem:[%s3 + $0x58] sm:$0xff]
  %v146 = vld [vmem:[%s3 + $0x60] sm:$0xff]
  %v147 = vld [vmem:[%s3 + $0x68] sm:$0xff]
  %v148 = vld [vmem:[%s3 + $0x70] sm:$0xff]
  %v149 = vld [vmem:[%s3 + $0x78] sm:$0xff]
  %150 = vmatprep.subr.mxu0 0.0
  %151 = vmatpush1.msra.mxu0 %v134
  %152 = vmatprep.subr.mxu0 0.0
  %153 = vmatpush1.msra.mxu0 %v135
  %154 = vmatprep.subr.mxu0 0.0
  %155 = vmatpush1.msra.mxu0 %v136
  %156 = vmatprep.subr.mxu0 0.0
  %157 = vmatpush1.msra.mxu0 %v137
  %158 = vmatprep.subr.mxu0 0.0
  %159 = vmatpush1.msra.mxu0 %v138
  %160 = vmatprep.subr.mxu0 0.0
  %161 = vmatpush1.msra.mxu0 %v139
  %162 = vmatprep.subr.mxu0 0.0
  %163 = vmatpush1.msra.mxu0 %v140
  %164 = vmatprep.subr.mxu0 0.0
  %165 = vmatpush1.msra.mxu0 %v141
  %166 = vmatprep.subr.mxu0 0.0
  %167 = vmatpush1.msra.mxu0 %v142
  %168 = vmatprep.subr.mxu0 0.0
  %169 = vmatpush1.msra.mxu0 %v143
  %170 = vmatprep.subr.mxu0 0.0
  %171 = vmatpush1.msra.mxu0 %v144
  %172 = vmatprep.subr.mxu0 0.0
  %173 = vmatpush1.msra.mxu0 %v145
  %174 = vmatprep.subr.mxu0 0.0
  %175 = vmatpush1.msra.mxu0 %v146
  %176 = vmatprep.subr.mxu0 0.0
  %177 = vmatpush1.msra.mxu0 %v147
  %178 = vmatprep.subr.mxu0 0.0
  %179 = vmatpush1.msra.mxu0 %v148
  %180 = vmatprep.subr.mxu0 0.0
  %181 = vmatpush1.msra.mxu0 %v149
  %182 = vmatprep.subr.mxu0 0.0
  %183 = vmatpush1.msra.mxu0 0.0
  %184 = vmatprep.subr.mxu0 0.0
  %185 = vmatpush1.msra.mxu0 0.0
  %186 = vmatprep.subr.mxu0 0.0
  %187 = vmatpush1.msra.mxu0 0.0
  %188 = vmatprep.subr.mxu0 0.0
  %189 = vmatpush1.msra.mxu0 0.0
  %190 = vmatprep.subr.mxu0 0.0
  %191 = vmatpush1.msra.mxu0 0.0
  %192 = vmatprep.subr.mxu0 0.0
  %193 = vmatpush1.msra.mxu0 0.0
  %194 = vmatprep.subr.mxu0 0.0
  %195 = vmatpush1.msra.mxu0 0.0
  %196 = vmatprep.subr.mxu0 0.0
  %197 = vmatpush1.msra.mxu0 0.0
  %198 = vmatprep.subr.mxu0 0.0
  %199 = vmatpush1.msra.mxu0 0.0
  %200 = vmatprep.subr.mxu0 0.0
  %201 = vmatpush1.msra.mxu0 0.0
  %202 = vmatprep.subr.mxu0 0.0
  %203 = vmatpush1.msra.mxu0 0.0
  %204 = vmatprep.subr.mxu0 0.0
  %205 = vmatpush1.msra.mxu0 0.0
  %206 = vmatprep.subr.mxu0 0.0
  %207 = vmatpush1.msra.mxu0 0.0
  %208 = vmatprep.subr.mxu0 0.0
  %209 = vmatpush1.msra.mxu0 0.0
  %210 = vmatprep.subr.mxu0 0.0
  %211 = vmatpush1.msra.mxu0 0.0
  %212 = vmatprep.subr.mxu0 0.0
  %213 = vmatpush1.msra.mxu0 0.0
  %214 = vmatprep.mubr.f32.mxu0 0.0
  %215 = vmatmul.mubr.f32.gmra.mrb[0].mxu0 %v130
  %v216 = vpop.f32.mrb[0].mxu0
  %v217 = vadd.f32 0.0, %v216
  %v218 = vpop.f32.mrb[0].mxu0
  %219 = vmatprep.mubr.f32.mxu0 0.0
  %220 = vmatmul.mubr.f32.gmra.mrb[0].mxu0 %v131
  %v221 = vpop.f32.mrb[0].mxu0
  %v222 = vadd.f32 0.0, %v221
  %v223 = vpop.f32.mrb[0].mxu0
  %224 = vdwg.mxu0
  %v225 = vadd.f32 %v132, %v217
  %v226 = vadd.f32 %v133, %v222
  %227 = vst [vmem:[%s5] sm:$0xff] %v225
  %228 = vst [vmem:[%s5 + $0x8] sm:$0xff] %v226
  %v229 = vld [vmem:[%s5] sm:$0xff]
  %v230 = vld [vmem:[%s5 + $0x8] sm:$0xff]
  %v231 = vld [vmem:[%s4] sm:$0x1]
  %v233 = vlaneseq
  %v234 = vshrl.u32 %v233, 7
  %v235 = vsub.s32 0, %v234
  %v236 = vrot.slane %v231, %v235
  %v238 = vadd.f32 %v229, %v236
  %v239 = vadd.f32 %v230, %v236
  %240 = vst [vmem:[%s5] sm:$0xff] %v238
  %241 = vst [vmem:[%s5 + $0x8] sm:$0xff] %v239
  // Predicated region
  $region22: #{feed_forward.1} parent=0 // pred_check
    _
  $region23: #{feed_forward.1} parent=0 // pred_check_branch
    %243 = sbr.rel (0) target = $region25
  $region24: #{feed_forward.1} parent=0 // pred_region
    _
  $region25: #{feed_forward.1} parent=0 // pred_fallthru
    _
  // Predicated region
  $region26: #{feed_forward.1} parent=0 // pred_check
    _
  $region27: #{feed_forward.1} parent=0 // pred_check_branch
    %245 = sbr.rel (0) target = $region29
  $region28: #{feed_forward.1} parent=0 // pred_region
    _
  $region29: #{feed_forward.1} parent=0 // pred_fallthru
    _

</llo_original>
